<compile_context>
chip_gen: v7x
topology: tpu7x:2x2x1
jax: 0.10.0
libtpu: 0.0.40
codegen_flags: <defaults>
</compile_context>

<pallas_src>
import functools

import jax
import jax.numpy as jnp
from jax.experimental import pallas as pl
from jax.experimental.pallas import tpu as pltpu


# ---- packed parameter slab layout: (208, 128) f32 ---------------------------
# rows [  0: 80), cols [0:120) : W2      (80,120)  (torch fc2.weight, as-is)
# rows [ 80:200), col 0        : w1      (120,)    (torch fc1.weight[:,0])
# rows [ 80:200), col 1        : b1      (120,)
# rows [ 80:160), col 2        : b2      (80,)
# rows [ 80:160), col 3        : W3[0,:] (80,)     (torch fc3.weight row 0)
# rows [ 80:160), col 4        : W3[1,:] (80,)
# row   80      , cols 5,6     : b3      (2,)
# everything else is zero (zero padding makes the K=128 fc2 dot exact).
_SLAB_ROWS = 208

# Batch-lane tile: 2K lanes amortizes the ~0.35us/step grid overhead while
# keeping per-tile intermediates ((128+80)*TILE_B*4 B ~ 1.7 MiB) far below the
# scoped-VMEM defaults on v5e (16 MiB), v6e (32 MiB) and v7x (32/64 MiB).
_TILE_B_MAX = 2048


def _round_up(n, m):
    return ((n + m - 1) // m) * m


def pack_params(params):
    """Pack torch-layout params into one lane-aligned slab (one DMA)."""
    w1, b1, w2, b2, w3, b3 = params
    slab = jnp.zeros((_SLAB_ROWS, 128), jnp.float32)
    slab = slab.at[0:80, 0:120].set(w2.astype(jnp.float32))
    slab = slab.at[80:200, 0].set(w1[:, 0].astype(jnp.float32))
    slab = slab.at[80:200, 1].set(b1.astype(jnp.float32))
    slab = slab.at[80:160, 2].set(b2.astype(jnp.float32))
    slab = slab.at[80:160, 3].set(w3[0, :].astype(jnp.float32))
    slab = slab.at[80:160, 4].set(w3[1, :].astype(jnp.float32))
    slab = slab.at[80, 5].set(b3[0].astype(jnp.float32))
    slab = slab.at[80, 6].set(b3[1].astype(jnp.float32))
    return slab


def _sigmoid(z):
    # sigmoid(z) = 0.5*(1 + tanh(z/2)): ONE EUP push per element instead of
    # exp + divide; bit-close to jax.nn.sigmoid in f32 (<< 1e-5).
    return 0.5 * jnp.tanh(0.5 * z) + 0.5


def mlp_kernel(x_ref, p_ref, o_ref):
    """Per-batch-tile fc1+fc2+fc3 (all sigmoid).  Softmax is a second pass."""
    # Static slices of the packed slab (no extra DMAs, sublane-aligned starts).
    w1 = p_ref[80:208, 0:1]        # (128, 1)  rows 120:128 are zero padding
    b1 = p_ref[80:208, 1:2]        # (128, 1)
    w2 = p_ref[0:80, :]            # (80, 128) cols 120:128 are zero padding
    b2 = p_ref[80:160, 2:3]        # (80, 1)
    w3c0 = p_ref[80:160, 3:4]      # (80, 1)
    w3c1 = p_ref[80:160, 4:5]      # (80, 1)
    b3_0 = p_ref[80:81, 5:6]       # (1, 1)
    b3_1 = p_ref[80:81, 6:7]       # (1, 1)

    x = x_ref[...]                 # (1, TB) -- batch on lanes, lane-dense

    # fc1: Linear(1,120)+Sigmoid.  K=1 -> pure VPU broadcast outer product.
    # Padded rows give sigmoid(0)=0.5 but hit zero columns of w2 below.
    h1 = _sigmoid(w1 * x + b1)                                      # (128, TB)

    # fc2: Linear(120,80)+Sigmoid.  One full-tile MXU dot, K padded to 128.
    h2 = _sigmoid(
        jnp.dot(w2, h1, preferred_element_type=jnp.float32) + b2)   # (80, TB)

    # fc3: Linear(80,2)+Sigmoid.  N=2 -> skip the MXU; two VPU multiplies +
    # sublane (XLU) reductions, rows written directly (no sublane concat).
    z0 = jnp.sum(w3c0 * h2, axis=0, keepdims=True) + b3_0           # (1, TB)
    z1 = jnp.sum(w3c1 * h2, axis=0, keepdims=True) + b3_1           # (1, TB)
    o_ref[0:1, :] = _sigmoid(z0)
    o_ref[1:2, :] = _sigmoid(z1)


def softmax_dim0_kernel(h_ref, o_ref, *, batch):
    """Global Softmax(dim=0): softmax across the batch (lane) axis, per row."""
    h = h_ref[...]                                                  # (2, Bp)
    lane = jax.lax.broadcasted_iota(jnp.int32, (1, h.shape[1]), 1)  # (1, Bp)
    valid = lane < batch                                            # built once
    m = jnp.max(jnp.where(valid, h, -jnp.inf), axis=1, keepdims=True)   # (2,1)
    e = jnp.where(valid, jnp.exp(h - m), 0.0)                       # (2, Bp)
    s = jnp.sum(e, axis=1, keepdims=True)                           # (2, 1)
    inv = 1.0 / s                # 2 exact divides total (not 2*Bp), rest is VPU
    o_ref[...] = e * inv                                            # lane-dense


@jax.jit
def prime_number_network(x, packed_params):
    """x: (B, 1) f32, packed_params: (208, 128) f32.  Returns (B, 2) f32."""
    B = x.shape[0]
    tile_b = min(_TILE_B_MAX, _round_up(B, 128))
    Bp = _round_up(B, tile_b)
    num_tiles = Bp // tile_b

    # Put the batch on the lane axis, zero-padded to a full tile multiple.
    xT = jnp.zeros((1, Bp), jnp.float32).at[0, :B].set(x[:, 0].astype(jnp.float32))

    cost = pl.CostEstimate(
        flops=(2 * 80 * 128 + 2 * 128 + 4 * 80) * Bp,
        transcendentals=210 * Bp,
        bytes_accessed=4 * Bp + 8 * Bp + _SLAB_ROWS * 128 * 4,
    )

    # Pass 1: pipelined, batch-tiled MLP (fc1..fc3 sigmoid outputs).
    h3 = pl.pallas_call(
        mlp_kernel,
        out_shape=jax.ShapeDtypeStruct((2, Bp), jnp.float32),
        grid_spec=pltpu.PrefetchScalarGridSpec(
            num_scalar_prefetch=0,
            grid=(num_tiles,),
            in_specs=[
                pl.BlockSpec((1, tile_b), lambda i: (0, i)),
                # Constant block index -> the param slab is DMA'd once and
                # stays resident across all batch tiles.
                pl.BlockSpec((_SLAB_ROWS, 128), lambda i: (0, 0)),
            ],
            out_specs=pl.BlockSpec((2, tile_b), lambda i: (0, i)),
        ),
        compiler_params=pltpu.CompilerParams(
            dimension_semantics=("parallel",)),
        cost_estimate=cost,
    )(xT, packed_params)

    # Pass 2: global softmax over the batch axis (cannot be fused per-tile
    # because Softmax(dim=0) spans the whole batch).
    vmem = pl.BlockSpec(memory_space=pltpu.MemorySpace.VMEM)
    out = pl.pallas_call(
        functools.partial(softmax_dim0_kernel, batch=B),
        out_shape=jax.ShapeDtypeStruct((2, Bp), jnp.float32),
        in_specs=[vmem],
        out_specs=vmem,
    )(h3)

    return out[:, :B].T                                             # (B, 2)


def init_params(key):
    """PyTorch-style Linear init (uniform +-1/sqrt(fan_in)), torch layout:
    W (out, in), b (out,)."""
    def linear(key, fan_in, fan_out):
        kw, kb = jax.random.split(key)
        bound = 1.0 / (fan_in ** 0.5)
        w = jax.random.uniform(kw, (fan_out, fan_in), jnp.float32, -bound, bound)
        b = jax.random.uniform(kb, (fan_out,), jnp.float32, -bound, bound)
        return w, b

    k1, k2, k3 = jax.random.split(key, 3)
    w1, b1 = linear(k1, 1, 120)
    w2, b2 = linear(k2, 120, 80)
    w3, b3 = linear(k3, 80, 2)
    return (w1, b1, w2, b2, w3, b3)


def reference_forward(x, params):
    """Pure-JAX reference (torch semantics: y = x @ W.T + b; Softmax(dim=0))."""
    w1, b1, w2, b2, w3, b3 = params
    h = jax.nn.sigmoid(x @ w1.T + b1)
    h = jax.nn.sigmoid(h @ w2.T + b2)
    h = jax.nn.sigmoid(h @ w3.T + b3)
    return jax.nn.softmax(h, axis=0)


if __name__ == "__main__":
    key = jax.random.PRNGKey(0)
    kp, kx = jax.random.split(key)
    params = init_params(kp)
    packed = pack_params(params)   # pack once, reuse across calls

    B = 8  # input feature dim is 1 per the module definition
    x = jax.random.uniform(kx, (B, 1), jnp.float32, 2.0, 100.0)

    out = jax.block_until_ready(prime_number_network(x, packed))
    ref = reference_forward(x, params)

    assert out.shape == (B, 2)
    assert jnp.allclose(out, ref, atol=1e-5, rtol=1e-5)

    print("KERNEL_OK")
</pallas_src>

<mosaic_0001>
module attributes {stable_mosaic.version = 11 : i64} {
  func.func @mlp_kernel(%arg0: i32, %arg1: memref<1x128xf32, #tpu.memory_space<vmem>>, %arg2: memref<208x128xf32, #tpu.memory_space<vmem>>, %arg3: memref<2x128xf32, #tpu.memory_space<vmem>>) attributes {dimension_semantics = [#tpu.dimension_semantics<parallel>], iteration_bounds = array<i64: 1>, scalar_prefetch = 0 : i64, scratch_operands = 0 : i64, tpu.core_type = #tpu.core_type<tc>, window_params = [{transform_indices = @transform_0, window_bounds = array<i64: 1, 128>}, {pipeline_mode = #tpu.pipeline_mode<synchronous>, transform_indices = @transform_1, window_bounds = array<i64: 208, 128>}, {transform_indices = @transform_2, window_bounds = array<i64: 2, 128>}]} {
    %c80 = arith.constant 80 : index
    %c0 = arith.constant 0 : index
    %0 = vector.load %arg2[%c80, %c0] : memref<208x128xf32, #tpu.memory_space<vmem>>, vector<128x1xf32>
    %c80_0 = arith.constant 80 : index
    %c1 = arith.constant 1 : index
    %1 = vector.load %arg2[%c80_0, %c1] : memref<208x128xf32, #tpu.memory_space<vmem>>, vector<128x1xf32>
    %c0_1 = arith.constant 0 : index
    %c0_2 = arith.constant 0 : index
    %2 = vector.load %arg2[%c0_1, %c0_2] : memref<208x128xf32, #tpu.memory_space<vmem>>, vector<80x128xf32>
    %c80_3 = arith.constant 80 : index
    %c2 = arith.constant 2 : index
    %3 = vector.load %arg2[%c80_3, %c2] : memref<208x128xf32, #tpu.memory_space<vmem>>, vector<80x1xf32>
    %c80_4 = arith.constant 80 : index
    %c3 = arith.constant 3 : index
    %4 = vector.load %arg2[%c80_4, %c3] : memref<208x128xf32, #tpu.memory_space<vmem>>, vector<80x1xf32>
    %c80_5 = arith.constant 80 : index
    %c4 = arith.constant 4 : index
    %5 = vector.load %arg2[%c80_5, %c4] : memref<208x128xf32, #tpu.memory_space<vmem>>, vector<80x1xf32>
    %c80_6 = arith.constant 80 : index
    %c5 = arith.constant 5 : index
    %6 = vector.load %arg2[%c80_6, %c5] : memref<208x128xf32, #tpu.memory_space<vmem>>, vector<1x1xf32>
    %c80_7 = arith.constant 80 : index
    %c6 = arith.constant 6 : index
    %7 = vector.load %arg2[%c80_7, %c6] : memref<208x128xf32, #tpu.memory_space<vmem>>, vector<1x1xf32>
    %c0_8 = arith.constant 0 : index
    %c0_9 = arith.constant 0 : index
    %8 = vector.load %arg1[%c0_8, %c0_9] : memref<1x128xf32, #tpu.memory_space<vmem>>, vector<1x128xf32>
    %9 = vector.broadcast %0 : vector<128x1xf32> to vector<128x128xf32>
    %10 = vector.broadcast %8 : vector<1x128xf32> to vector<128x128xf32>
    %11 = arith.mulf %9, %10 : vector<128x128xf32>
    %12 = vector.broadcast %1 : vector<128x1xf32> to vector<128x128xf32>
    %13 = arith.addf %11, %12 : vector<128x128xf32>
    %cst = arith.constant 5.000000e-01 : f32
    %14 = vector.broadcast %cst : f32 to vector<128x128xf32>
    %15 = arith.mulf %14, %13 : vector<128x128xf32>
    %16 = math.tanh %15 : vector<128x128xf32>
    %cst_10 = arith.constant 5.000000e-01 : f32
    %17 = vector.broadcast %cst_10 : f32 to vector<128x128xf32>
    %18 = arith.mulf %17, %16 : vector<128x128xf32>
    %cst_11 = arith.constant 5.000000e-01 : f32
    %19 = vector.broadcast %cst_11 : f32 to vector<128x128xf32>
    %20 = arith.addf %18, %19 : vector<128x128xf32>
    %cst_12 = arith.constant dense<0.000000e+00> : vector<80x128xf32>
    %21 = tpu.matmul %2, %20, %cst_12 {dimension_numbers = #tpu.dot_dimension_numbers<[1], [0], [0], [1], [0, 0, 1, 1], [], []>} : vector<80x128xf32>, vector<128x128xf32>, vector<80x128xf32> -> vector<80x128xf32>
    %22 = vector.broadcast %3 : vector<80x1xf32> to vector<80x128xf32>
    %23 = arith.addf %21, %22 : vector<80x128xf32>
    %cst_13 = arith.constant 5.000000e-01 : f32
    %24 = vector.broadcast %cst_13 : f32 to vector<80x128xf32>
    %25 = arith.mulf %24, %23 : vector<80x128xf32>
    %26 = math.tanh %25 : vector<80x128xf32>
    %cst_14 = arith.constant 5.000000e-01 : f32
    %27 = vector.broadcast %cst_14 : f32 to vector<80x128xf32>
    %28 = arith.mulf %27, %26 : vector<80x128xf32>
    %cst_15 = arith.constant 5.000000e-01 : f32
    %29 = vector.broadcast %cst_15 : f32 to vector<80x128xf32>
    %30 = arith.addf %28, %29 : vector<80x128xf32>
    %31 = vector.broadcast %4 : vector<80x1xf32> to vector<80x128xf32>
    %32 = arith.mulf %31, %30 : vector<80x128xf32>
    %cst_16 = arith.constant dense<0.000000e+00> : vector<128xf32>
    %33 = vector.multi_reduction <add>, %32, %cst_16 [0] : vector<80x128xf32> to vector<128xf32>
    %34 = vector.shape_cast %33 : vector<128xf32> to vector<1x128xf32>
    %35 = vector.broadcast %6 : vector<1x1xf32> to vector<1x128xf32>
    %36 = arith.addf %34, %35 : vector<1x128xf32>
    %37 = vector.broadcast %5 : vector<80x1xf32> to vector<80x128xf32>
    %38 = arith.mulf %37, %30 : vector<80x128xf32>
    %cst_17 = arith.constant dense<0.000000e+00> : vector<128xf32>
    %39 = vector.multi_reduction <add>, %38, %cst_17 [0] : vector<80x128xf32> to vector<128xf32>
    %40 = vector.shape_cast %39 : vector<128xf32> to vector<1x128xf32>
    %41 = vector.broadcast %7 : vector<1x1xf32> to vector<1x128xf32>
    %42 = arith.addf %40, %41 : vector<1x128xf32>
    %cst_18 = arith.constant 5.000000e-01 : f32
    %43 = vector.broadcast %cst_18 : f32 to vector<1x128xf32>
    %44 = arith.mulf %43, %36 : vector<1x128xf32>
    %45 = math.tanh %44 : vector<1x128xf32>
    %cst_19 = arith.constant 5.000000e-01 : f32
    %46 = vector.broadcast %cst_19 : f32 to vector<1x128xf32>
    %47 = arith.mulf %46, %45 : vector<1x128xf32>
    %cst_20 = arith.constant 5.000000e-01 : f32
    %48 = vector.broadcast %cst_20 : f32 to vector<1x128xf32>
    %49 = arith.addf %47, %48 : vector<1x128xf32>
    %c0_21 = arith.constant 0 : index
    %c0_22 = arith.constant 0 : index
    %50 = vector.load %arg3[%c0_21, %c0_22] : memref<2x128xf32, #tpu.memory_space<vmem>>, vector<1x128xf32>
    tpu.vector_store %arg3[%c0_21, %c0_22], %49 {strides = array<i32>} : memref<2x128xf32, #tpu.memory_space<vmem>>, vector<1x128xf32>,
    %cst_23 = arith.constant 5.000000e-01 : f32
    %51 = vector.broadcast %cst_23 : f32 to vector<1x128xf32>
    %52 = arith.mulf %51, %42 : vector<1x128xf32>
    %53 = math.tanh %52 : vector<1x128xf32>
    %cst_24 = arith.constant 5.000000e-01 : f32
    %54 = vector.broadcast %cst_24 : f32 to vector<1x128xf32>
    %55 = arith.mulf %54, %53 : vector<1x128xf32>
    %cst_25 = arith.constant 5.000000e-01 : f32
    %56 = vector.broadcast %cst_25 : f32 to vector<1x128xf32>
    %57 = arith.addf %55, %56 : vector<1x128xf32>
    %c1_26 = arith.constant 1 : index
    %c0_27 = arith.constant 0 : index
    %58 = vector.load %arg3[%c1_26, %c0_27] : memref<2x128xf32, #tpu.memory_space<vmem>>, vector<1x128xf32>
    tpu.vector_store %arg3[%c1_26, %c0_27], %57 {strides = array<i32>} : memref<2x128xf32, #tpu.memory_space<vmem>>, vector<1x128xf32>,
    return
  }
  func.func @transform_0(%arg0: i32) -> (i32, i32) {
    %c0_i32 = arith.constant 0 : i32
    %c0_i32_0 = arith.constant 0 : i32
    return %c0_i32, %arg0 : i32, i32
  }
  func.func @transform_1(%arg0: i32) -> (i32, i32) {
    %c0_i32 = arith.constant 0 : i32
    %c0_i32_0 = arith.constant 0 : i32
    %c0_i32_1 = arith.constant 0 : i32
    return %c0_i32, %c0_i32_0 : i32, i32
  }
  func.func @transform_2(%arg0: i32) -> (i32, i32) {
    %c0_i32 = arith.constant 0 : i32
    %c0_i32_0 = arith.constant 0 : i32
    return %c0_i32, %arg0 : i32, i32
  }
}

module attributes {stable_mosaic.version = 11 : i64} {
  func.func @softmax_dim0_kernel(%arg0: memref<2x128xf32, #tpu.memory_space<vmem>>, %arg1: memref<2x128xf32, #tpu.memory_space<vmem>>) attributes {dimension_semantics = [], scalar_prefetch = 0 : i64, scratch_operands = 0 : i64, tpu.core_type = #tpu.core_type<tc>} {
    %c0 = arith.constant 0 : index
    %c0_0 = arith.constant 0 : index
    %0 = vector.load %arg0[%c0, %c0_0] : memref<2x128xf32, #tpu.memory_space<vmem>>, vector<2x128xf32>
    %1 = tpu.iota {dimensions = array<i32: 1>} : vector<1x128xi32>
    %c8_i32 = arith.constant 8 : i32
    %2 = vector.broadcast %c8_i32 : i32 to vector<1x128xi32>
    %3 = arith.cmpi slt, %1, %2 : vector<1x128xi32>
    %cst = arith.constant 0xFF800000 : f32
    %4 = vector.shape_cast %3 : vector<1x128xi1> to vector<1x128xi1>
    %5 = vector.broadcast %4 : vector<1x128xi1> to vector<2x128xi1>
    %6 = vector.broadcast %cst : f32 to vector<2x128xf32>
    %7 = arith.select %5, %0, %6 : vector<2x128xi1>, vector<2x128xf32>
    %cst_1 = arith.constant dense<0xFF800000> : vector<2xf32>
    %8 = vector.multi_reduction <maximumf>, %7, %cst_1 [1] : vector<2x128xf32> to vector<2xf32>
    %9 = vector.shape_cast %8 : vector<2xf32> to vector<2x1xf32>
    %10 = vector.broadcast %9 : vector<2x1xf32> to vector<2x128xf32>
    %11 = arith.subf %0, %10 : vector<2x128xf32>
    %12 = math.exp %11 : vector<2x128xf32>
    %cst_2 = arith.constant 0.000000e+00 : f32
    %13 = vector.shape_cast %3 : vector<1x128xi1> to vector<1x128xi1>
    %14 = vector.broadcast %13 : vector<1x128xi1> to vector<2x128xi1>
    %15 = vector.broadcast %cst_2 : f32 to vector<2x128xf32>
    %16 = arith.select %14, %12, %15 : vector<2x128xi1>, vector<2x128xf32>
    %cst_3 = arith.constant dense<0.000000e+00> : vector<2xf32>
    %17 = vector.multi_reduction <add>, %16, %cst_3 [1] : vector<2x128xf32> to vector<2xf32>
    %18 = vector.shape_cast %17 : vector<2xf32> to vector<2x1xf32>
    %cst_4 = arith.constant 1.000000e+00 : f32
    %19 = vector.broadcast %cst_4 : f32 to vector<2x1xf32>
    %20 = arith.divf %19, %18 : vector<2x1xf32>
    %21 = vector.broadcast %20 : vector<2x1xf32> to vector<2x128xf32>
    %22 = arith.mulf %16, %21 : vector<2x128xf32>
    %c0_5 = arith.constant 0 : index
    %c0_6 = arith.constant 0 : index
    %23 = vector.load %arg1[%c0_5, %c0_6] : memref<2x128xf32, #tpu.memory_space<vmem>>, vector<2x128xf32>
    tpu.vector_store %arg1[%c0_5, %c0_6], %22 {strides = array<i32>} : memref<2x128xf32, #tpu.memory_space<vmem>>, vector<2x128xf32>,
    return
  }
}

</mosaic_0001>

<llo_original>
// kernel: prime_number_network.3
$region0: #{prime_number_network.3}
  #allocation0 [shape = 'u32[]', space=smem, size = 0x4, offset = 0x4, fixed_abs, tag = 'smem constant byte address 0x4 - core index']
  #allocation1 [shape = 'u32[144,128]{1,0:T(1,128)}', space=vmem, size = 0x12000, scoped, tag = 'internal scratch']
  %s0 = inlined_call_operand.vmem [shape: f32[2,128], index: 0, kind: input, shape index: {}]
  %s1 = inlined_call_operand.vmem [shape: f32[2,128], index: 1, kind: output, shape index: {}]
  %s2 = sld [smem:[#allocation0]]
  $region14: #{prime_number_network.3} parent=0
    _
  %s4 = ssub.s32 1, %s2
  %s5 = scalar_select 0, %s4, %s2
  // Predicated region
  $region2: #{prime_number_network.3} parent=0 // pred_check
    _
  $region3: #{prime_number_network.3} parent=0 // pred_check_branch
    %7 = sbr.rel (0) target = $region5
  $region4: #{prime_number_network.3} parent=0 // pred_region
    _
  $region5: #{prime_number_network.3} parent=0 // pred_fallthru
    _
  %v8 = vld [vmem:[%s0] sm:$0x3]
  %v9 = vlaneseq
  %v10 = vand.u32 %v9, 127
  %vm11 = vcmp.lt.s32.totalorder %v10, 8
  %v12 = vsel %vm11, 1, 0
  %vm13 = vcmp.eq.s32.totalorder %v12, 1
  %v14 = vsel %vm13, %v8, -inf
  %vm15 = vcmask 1041408
  %v16 = vsel %vm15, %v14, -inf
  %17 = vmax.xlane.f32.xlu0 %v16
  %v18 = vpop.xlane.xlu0 %17
  %v19 = vsub.f32 %v8, %v18
  %v20 = vmul.f32 %v19, 1.442695
  %v21 = vpow.pop %v20
  %v22 = vsel %vm13, %v21, 0.0
  %v23 = vsel %vm15, %v22, 0.0
  %24 = vadd.xlane.f32.xlu0 %v23
  %v25 = vpop.xlane.xlu0 %24
  %v26 = vrcp.pop %v25
  %v27 = vmul.f32 1.0, %v26
  %v28 = vmul.f32 %v22, %v27
  %29 = vst [vmem:[%s1] sm:$0x3] %v28
  // Predicated region
  $region6: #{prime_number_network.3} parent=0 // pred_check
    _
  $region7: #{prime_number_network.3} parent=0 // pred_check_branch
    %31 = sbr.rel (0) target = $region9
  $region8: #{prime_number_network.3} parent=0 // pred_region
    _
  $region9: #{prime_number_network.3} parent=0 // pred_fallthru
    _
  // Predicated region
  $region10: #{prime_number_network.3} parent=0 // pred_check
    _
  $region11: #{prime_number_network.3} parent=0 // pred_check_branch
    %33 = sbr.rel (0) target = $region13
  $region12: #{prime_number_network.3} parent=0 // pred_region
    _
  $region13: #{prime_number_network.3} parent=0 // pred_fallthru
    _

// kernel: prime_number_network.2
$region0: #{prime_number_network.2}
  #allocation0 [shape = 'u32[]', space=smem, size = 0x4, offset = 0x4, fixed_abs, tag = 'smem constant byte address 0x4 - core index']
  #allocation1 [shape = 'u32[144,128]{1,0:T(1,128)}', space=vmem, size = 0x12000, scoped, tag = 'internal scratch']
  %s0 = inlined_call_operand.vmem [shape: f32[1,128], index: 0, kind: input, shape index: {}]
  %s1 = inlined_call_operand.hbm [shape: f32[208,128], index: 1, kind: input, shape index: {}]
  %s2 = inlined_call_operand.vmem [shape: f32[2,128], index: 2, kind: output, shape index: {}]
  %s3 = sld [smem:[#allocation0]]
  $region22: #{prime_number_network.2} parent=0
    _
  %s5 = ssub.s32 1, %s3
  %s6 = scalar_select 0, %s5, %s3
  $region1: #{prime_number_network.2} parent=0
    #allocation2 [shape = 'u8[106496]{0}', space=vmem, size = 0x1a000, scoped, tag = 'input window, operand 1, single buffered']
    #allocation3 [shape = 's32[1]{0}', space=sflag, size = 0x4, scoped, tag = 'scoped memory for prime_number_network.2']
    %7 = vsyncpa [#allocation3], 0
    // Predicated region
    $region2: #{prime_number_network.2} parent=1 // pred_check
      _
    $region3: #{prime_number_network.2} parent=1 // pred_check_branch
      %9 = sbr.rel (0) target = $region5
    $region4: #{prime_number_network.2} parent=1 // pred_region
      _
    $region5: #{prime_number_network.2} parent=1 // pred_fallthru
      _
    // Predicated region
    $region6: #{prime_number_network.2} parent=1 // pred_check
      _
    $region7: #{prime_number_network.2} parent=1 // pred_check_branch
      %11 = sbr.rel (0) target = $region9
    $region8: #{prime_number_network.2} parent=1 // pred_region
      %s13 = ssub.s32 3328, 3328
      %14 = vsyncadd [#allocation3], %s13
      %s15 = sshll.u32 [#allocation2], 4
      %s16 = int_to_ptr.vmem [resolvable:$true] %s15
      %21 = dma.hbm_to_vmem [thread:$0]  %s1, 3328, %s16, [#allocation3], 128, 128, 8
    $region9: #{prime_number_network.2} parent=1 // pred_fallthru
      _
    // Predicated region
    $region10: #{prime_number_network.2} parent=1 // pred_check
      _
    $region11: #{prime_number_network.2} parent=1 // pred_check_branch
      %23 = sbr.rel (0) target = $region13
    $region12: #{prime_number_network.2} parent=1 // pred_region
      %24 = dma.done [#allocation3], 3328
    $region13: #{prime_number_network.2} parent=1 // pred_fallthru
      _
    %v25 = vld [vmem:[#allocation2 + $0x50] sm:$0xff]
    %v26 = vld [vmem:[#allocation2 + $0x58] sm:$0xff]
    %v27 = vld [vmem:[#allocation2 + $0x60] sm:$0xff]
    %v28 = vld [vmem:[#allocation2 + $0x68] sm:$0xff]
    %v29 = vld [vmem:[#allocation2 + $0x70] sm:$0xff]
    %v30 = vld [vmem:[#allocation2 + $0x78] sm:$0xff]
    %v31 = vld [vmem:[#allocation2 + $0x80] sm:$0xff]
    %v32 = vld [vmem:[#allocation2 + $0x88] sm:$0xff]
    %v33 = vld [vmem:[#allocation2 + $0x90] sm:$0xff]
    %v34 = vld [vmem:[#allocation2 + $0x98] sm:$0xff]
    %v35 = vld [vmem:[#allocation2 + $0xa0] sm:$0xff]
    %v36 = vld [vmem:[#allocation2 + $0xa8] sm:$0xff]
    %v37 = vld [vmem:[#allocation2 + $0xb0] sm:$0xff]
    %v38 = vld [vmem:[#allocation2 + $0xb8] sm:$0xff]
    %v39 = vld [vmem:[#allocation2 + $0xc0] sm:$0xff]
    %v40 = vld [vmem:[#allocation2 + $0xc8] sm:$0xff]
    %v41 = vld [vmem:[#allocation2] sm:$0xff]
    %v42 = vld [vmem:[#allocation2 + $0x8] sm:$0xff]
    %v43 = vld [vmem:[#allocation2 + $0x10] sm:$0xff]
    %v44 = vld [vmem:[#allocation2 + $0x18] sm:$0xff]
    %v45 = vld [vmem:[#allocation2 + $0x20] sm:$0xff]
    %v46 = vld [vmem:[#allocation2 + $0x28] sm:$0xff]
    %v47 = vld [vmem:[#allocation2 + $0x30] sm:$0xff]
    %v48 = vld [vmem:[#allocation2 + $0x38] sm:$0xff]
    %v49 = vld [vmem:[#allocation2 + $0x40] sm:$0xff]
    %v50 = vld [vmem:[#allocation2 + $0x48] sm:$0xff]
    %v51 = vld [vmem:[#allocation2 + $0x50] sm:$0xff]
    %v52 = vld [vmem:[#allocation2 + $0x58] sm:$0xff]
    %v53 = vld [vmem:[#allocation2 + $0x60] sm:$0xff]
    %v54 = vld [vmem:[#allocation2 + $0x68] sm:$0xff]
    %v55 = vld [vmem:[#allocation2 + $0x70] sm:$0xff]
    %v56 = vld [vmem:[#allocation2 + $0x78] sm:$0xff]
    %v57 = vld [vmem:[#allocation2 + $0x80] sm:$0xff]
    %v58 = vld [vmem:[#allocation2 + $0x88] sm:$0xff]
    %v59 = vld [vmem:[#allocation2 + $0x90] sm:$0xff]
    %v60 = vld [vmem:[#allocation2 + $0x98] sm:$0xff]
    %v61 = vld [vmem:[#allocation2 + $0x50] sm:$0x1]
    %v62 = vld [vmem:[%s0] sm:$0x1]
    %64 = vset.pattern.permute.xlu0 0
    %65 = vperm.xlu0 %64, %v25
    %v66 = vpop.permute.xlu0 %65
    %69 = vset.pattern.permute.xlu0 0
    %70 = vperm.xlu0 %69, %v26
    %v71 = vpop.permute.xlu0 %70
    %74 = vset.pattern.permute.xlu0 0
    %75 = vperm.xlu0 %74, %v27
    %v76 = vpop.permute.xlu0 %75
    %79 = vset.pattern.permute.xlu0 0
    %80 = vperm.xlu0 %79, %v28
    %v81 = vpop.permute.xlu0 %80
    %84 = vset.pattern.permute.xlu0 0
    %85 = vperm.xlu0 %84, %v29
    %v86 = vpop.permute.xlu0 %85
    %89 = vset.pattern.permute.xlu0 0
    %90 = vperm.xlu0 %89, %v30
    %v91 = vpop.permute.xlu0 %90
    %94 = vset.pattern.permute.xlu0 0
    %95 = vperm.xlu0 %94, %v31
    %v96 = vpop.permute.xlu0 %95
    %99 = vset.pattern.permute.xlu0 0
    %100 = vperm.xlu0 %99, %v32
    %v101 = vpop.permute.xlu0 %100
    %104 = vset.pattern.permute.xlu0 0
    %105 = vperm.xlu0 %104, %v33
    %v106 = vpop.permute.xlu0 %105
    %109 = vset.pattern.permute.xlu0 0
    %110 = vperm.xlu0 %109, %v34
    %v111 = vpop.permute.xlu0 %110
    %114 = vset.pattern.permute.xlu0 0
    %115 = vperm.xlu0 %114, %v35
    %v116 = vpop.permute.xlu0 %115
    %119 = vset.pattern.permute.xlu0 0
    %120 = vperm.xlu0 %119, %v36
    %v121 = vpop.permute.xlu0 %120
    %124 = vset.pattern.permute.xlu0 0
    %125 = vperm.xlu0 %124, %v37
    %v126 = vpop.permute.xlu0 %125
    %129 = vset.pattern.permute.xlu0 0
    %130 = vperm.xlu0 %129, %v38
    %v131 = vpop.permute.xlu0 %130
    %134 = vset.pattern.permute.xlu0 0
    %135 = vperm.xlu0 %134, %v39
    %v136 = vpop.permute.xlu0 %135
    %139 = vset.pattern.permute.xlu0 0
    %140 = vperm.xlu0 %139, %v40
    %v141 = vpop.permute.xlu0 %140
    %v144 = vlaneseq
    %v145 = vshrl.u32 %v144, 7
    %v146 = vsub.s32 0, %v145
    %v147 = vrot.slane %v62, %v146
    %v149 = vmul.f32 %v66, %v147
    %v150 = vmul.f32 %v71, %v147
    %v151 = vmul.f32 %v76, %v147
    %v152 = vmul.f32 %v81, %v147
    %v153 = vmul.f32 %v86, %v147
    %v154 = vmul.f32 %v91, %v147
    %v155 = vmul.f32 %v96, %v147
    %v156 = vmul.f32 %v101, %v147
    %v157 = vmul.f32 %v106, %v147
    %v158 = vmul.f32 %v111, %v147
    %v159 = vmul.f32 %v116, %v147
    %v160 = vmul.f32 %v121, %v147
    %v161 = vmul.f32 %v126, %v147
    %v162 = vmul.f32 %v131, %v147
    %v163 = vmul.f32 %v136, %v147
    %v164 = vmul.f32 %v141, %v147
    %165 = vset.pattern.permute.xlu0 1
    %166 = vperm.xlu0 %165, %v25
    %v167 = vpop.permute.xlu0 %166
    %169 = vset.pattern.permute.xlu0 1
    %170 = vperm.xlu0 %169, %v26
    %v171 = vpop.permute.xlu0 %170
    %173 = vset.pattern.permute.xlu0 1
    %174 = vperm.xlu0 %173, %v27
    %v175 = vpop.permute.xlu0 %174
    %177 = vset.pattern.permute.xlu0 1
    %178 = vperm.xlu0 %177, %v28
    %v179 = vpop.permute.xlu0 %178
    %181 = vset.pattern.permute.xlu0 1
    %182 = vperm.xlu0 %181, %v29
    %v183 = vpop.permute.xlu0 %182
    %185 = vset.pattern.permute.xlu0 1
    %186 = vperm.xlu0 %185, %v30
    %v187 = vpop.permute.xlu0 %186
    %189 = vset.pattern.permute.xlu0 1
    %190 = vperm.xlu0 %189, %v31
    %v191 = vpop.permute.xlu0 %190
    %193 = vset.pattern.permute.xlu0 1
    %194 = vperm.xlu0 %193, %v32
    %v195 = vpop.permute.xlu0 %194
    %197 = vset.pattern.permute.xlu0 1
    %198 = vperm.xlu0 %197, %v33
    %v199 = vpop.permute.xlu0 %198
    %201 = vset.pattern.permute.xlu0 1
    %202 = vperm.xlu0 %201, %v34
    %v203 = vpop.permute.xlu0 %202
    %205 = vset.pattern.permute.xlu0 1
    %206 = vperm.xlu0 %205, %v35
    %v207 = vpop.permute.xlu0 %206
    %209 = vset.pattern.permute.xlu0 1
    %210 = vperm.xlu0 %209, %v36
    %v211 = vpop.permute.xlu0 %210
    %213 = vset.pattern.permute.xlu0 1
    %214 = vperm.xlu0 %213, %v37
    %v215 = vpop.permute.xlu0 %214
    %217 = vset.pattern.permute.xlu0 1
    %218 = vperm.xlu0 %217, %v38
    %v219 = vpop.permute.xlu0 %218
    %221 = vset.pattern.permute.xlu0 1
    %222 = vperm.xlu0 %221, %v39
    %v223 = vpop.permute.xlu0 %222
    %225 = vset.pattern.permute.xlu0 1
    %226 = vperm.xlu0 %225, %v40
    %v227 = vpop.permute.xlu0 %226
    %v229 = vadd.f32 %v149, %v167
    %v230 = vadd.f32 %v150, %v171
    %v231 = vadd.f32 %v151, %v175
    %v232 = vadd.f32 %v152, %v179
    %v233 = vadd.f32 %v153, %v183
    %v234 = vadd.f32 %v154, %v187
    %v235 = vadd.f32 %v155, %v191
    %v236 = vadd.f32 %v156, %v195
    %v237 = vadd.f32 %v157, %v199
    %v238 = vadd.f32 %v158, %v203
    %v239 = vadd.f32 %v159, %v207
    %v240 = vadd.f32 %v160, %v211
    %v241 = vadd.f32 %v161, %v215
    %v242 = vadd.f32 %v162, %v219
    %v243 = vadd.f32 %v163, %v223
    %v244 = vadd.f32 %v164, %v227
    %v245 = vmul.f32 %v229, 0.5
    %v246 = vmul.f32 %v230, 0.5
    %v247 = vmul.f32 %v231, 0.5
    %v248 = vmul.f32 %v232, 0.5
    %v249 = vmul.f32 %v233, 0.5
    %v250 = vmul.f32 %v234, 0.5
    %v251 = vmul.f32 %v235, 0.5
    %v252 = vmul.f32 %v236, 0.5
    %v253 = vmul.f32 %v237, 0.5
    %v254 = vmul.f32 %v238, 0.5
    %v255 = vmul.f32 %v239, 0.5
    %v256 = vmul.f32 %v240, 0.5
    %v257 = vmul.f32 %v241, 0.5
    %v258 = vmul.f32 %v242, 0.5
    %v259 = vmul.f32 %v243, 0.5
    %v260 = vmul.f32 %v244, 0.5
    %v261 = vtanh.pop %v245
    %v262 = vtanh.pop %v246
    %v263 = vtanh.pop %v247
    %v264 = vtanh.pop %v248
    %v265 = vtanh.pop %v249
    %v266 = vtanh.pop %v250
    %v267 = vtanh.pop %v251
    %v268 = vtanh.pop %v252
    %v269 = vtanh.pop %v253
    %v270 = vtanh.pop %v254
    %v271 = vtanh.pop %v255
    %v272 = vtanh.pop %v256
    %v273 = vtanh.pop %v257
    %v274 = vtanh.pop %v258
    %v275 = vtanh.pop %v259
    %v276 = vtanh.pop %v260
    %v277 = vmul.f32 %v261, 0.5
    %v278 = vmul.f32 %v262, 0.5
    %v279 = vmul.f32 %v263, 0.5
    %v280 = vmul.f32 %v264, 0.5
    %v281 = vmul.f32 %v265, 0.5
    %v282 = vmul.f32 %v266, 0.5
    %v283 = vmul.f32 %v267, 0.5
    %v284 = vmul.f32 %v268, 0.5
    %v285 = vmul.f32 %v269, 0.5
    %v286 = vmul.f32 %v270, 0.5
    %v287 = vmul.f32 %v271, 0.5
    %v288 = vmul.f32 %v272, 0.5
    %v289 = vmul.f32 %v273, 0.5
    %v290 = vmul.f32 %v274, 0.5
    %v291 = vmul.f32 %v275, 0.5
    %v292 = vmul.f32 %v276, 0.5
    %v293 = vadd.f32 %v277, 0.5
    %v294 = vadd.f32 %v278, 0.5
    %v295 = vadd.f32 %v279, 0.5
    %v296 = vadd.f32 %v280, 0.5
    %v297 = vadd.f32 %v281, 0.5
    %v298 = vadd.f32 %v282, 0.5
    %v299 = vadd.f32 %v283, 0.5
    %v300 = vadd.f32 %v284, 0.5
    %v301 = vadd.f32 %v285, 0.5
    %v302 = vadd.f32 %v286, 0.5
    %v303 = vadd.f32 %v287, 0.5
    %v304 = vadd.f32 %v288, 0.5
    %v305 = vadd.f32 %v289, 0.5
    %v306 = vadd.f32 %v290, 0.5
    %v307 = vadd.f32 %v291, 0.5
    %v308 = vadd.f32 %v292, 0.5
    %310 = vset.pattern.permute.xlu0 2
    %311 = vperm.xlu0 %310, %v51
    %v312 = vpop.permute.xlu0 %311
    %315 = vset.pattern.permute.xlu0 2
    %316 = vperm.xlu0 %315, %v52
    %v317 = vpop.permute.xlu0 %316
    %320 = vset.pattern.permute.xlu0 2
    %321 = vperm.xlu0 %320, %v53
    %v322 = vpop.permute.xlu0 %321
    %325 = vset.pattern.permute.xlu0 2
    %326 = vperm.xlu0 %325, %v54
    %v327 = vpop.permute.xlu0 %326
    %330 = vset.pattern.permute.xlu0 2
    %331 = vperm.xlu0 %330, %v55
    %v332 = vpop.permute.xlu0 %331
    %335 = vset.pattern.permute.xlu0 2
    %336 = vperm.xlu0 %335, %v56
    %v337 = vpop.permute.xlu0 %336
    %340 = vset.pattern.permute.xlu0 2
    %341 = vperm.xlu0 %340, %v57
    %v342 = vpop.permute.xlu0 %341
    %345 = vset.pattern.permute.xlu0 2
    %346 = vperm.xlu0 %345, %v58
    %v347 = vpop.permute.xlu0 %346
    %350 = vset.pattern.permute.xlu0 2
    %351 = vperm.xlu0 %350, %v59
    %v352 = vpop.permute.xlu0 %351
    %355 = vset.pattern.permute.xlu0 2
    %356 = vperm.xlu0 %355, %v60
    %v357 = vpop.permute.xlu0 %356
    %359 = vmatprep.subr.mxu0 0.0
    %360 = vmatpush1.msra.mxu0 %v293
    %361 = vmatprep.subr.mxu0 0.0
    %362 = vmatpush1.msra.mxu0 %v294
    %363 = vmatprep.subr.mxu0 0.0
    %364 = vmatpush1.msra.mxu0 %v295
    %365 = vmatprep.subr.mxu0 0.0
    %366 = vmatpush1.msra.mxu0 %v296
    %367 = vmatprep.subr.mxu0 0.0
    %368 = vmatpush1.msra.mxu0 %v297
    %369 = vmatprep.subr.mxu0 0.0
    %370 = vmatpush1.msra.mxu0 %v298
    %371 = vmatprep.subr.mxu0 0.0
    %372 = vmatpush1.msra.mxu0 %v299
    %373 = vmatprep.subr.mxu0 0.0
    %374 = vmatpush1.msra.mxu0 %v300
    %375 = vmatprep.subr.mxu0 0.0
    %376 = vmatpush1.msra.mxu0 %v301
    %377 = vmatprep.subr.mxu0 0.0
    %378 = vmatpush1.msra.mxu0 %v302
    %379 = vmatprep.subr.mxu0 0.0
    %380 = vmatpush1.msra.mxu0 %v303
    %381 = vmatprep.subr.mxu0 0.0
    %382 = vmatpush1.msra.mxu0 %v304
    %383 = vmatprep.subr.mxu0 0.0
    %384 = vmatpush1.msra.mxu0 %v305
    %385 = vmatprep.subr.mxu0 0.0
    %386 = vmatpush1.msra.mxu0 %v306
    %387 = vmatprep.subr.mxu0 0.0
    %388 = vmatpush1.msra.mxu0 %v307
    %389 = vmatprep.subr.mxu0 0.0
    %390 = vmatpush1.msra.mxu0 %v308
    %391 = vmatprep.subr.mxu0 0.0
    %392 = vmatpush1.msra.mxu0 0.0
    %393 = vmatprep.subr.mxu0 0.0
    %394 = vmatpush1.msra.mxu0 0.0
    %395 = vmatprep.subr.mxu0 0.0
    %396 = vmatpush1.msra.mxu0 0.0
    %397 = vmatprep.subr.mxu0 0.0
    %398 = vmatpush1.msra.mxu0 0.0
    %399 = vmatprep.subr.mxu0 0.0
    %400 = vmatpush1.msra.mxu0 0.0
    %401 = vmatprep.subr.mxu0 0.0
    %402 = vmatpush1.msra.mxu0 0.0
    %403 = vmatprep.subr.mxu0 0.0
    %404 = vmatpush1.msra.mxu0 0.0
    %405 = vmatprep.subr.mxu0 0.0
    %406 = vmatpush1.msra.mxu0 0.0
    %407 = vmatprep.subr.mxu0 0.0
    %408 = vmatpush1.msra.mxu0 0.0
    %409 = vmatprep.subr.mxu0 0.0
    %410 = vmatpush1.msra.mxu0 0.0
    %411 = vmatprep.subr.mxu0 0.0
    %412 = vmatpush1.msra.mxu0 0.0
    %413 = vmatprep.subr.mxu0 0.0
    %414 = vmatpush1.msra.mxu0 0.0
    %415 = vmatprep.subr.mxu0 0.0
    %416 = vmatpush1.msra.mxu0 0.0
    %417 = vmatprep.subr.mxu0 0.0
    %418 = vmatpush1.msra.mxu0 0.0
    %419 = vmatprep.subr.mxu0 0.0
    %420 = vmatpush1.msra.mxu0 0.0
    %421 = vmatprep.subr.mxu0 0.0
    %422 = vmatpush1.msra.mxu0 0.0
    %423 = vmatprep.mubr.f32.mxu0 0.0
    %424 = vmatmul.mubr.f32.gmra.mrb[0].mxu0 %v41
    %v425 = vpop.f32.mrb[0].mxu0
    %v426 = vadd.f32 %v312, %v425
    %v427 = vpop.f32.mrb[0].mxu0
    %428 = vmatprep.mubr.f32.mxu0 0.0
    %429 = vmatmul.mubr.f32.gmra.mrb[0].mxu0 %v42
    %v430 = vpop.f32.mrb[0].mxu0
    %v431 = vadd.f32 %v317, %v430
    %v432 = vpop.f32.mrb[0].mxu0
    %433 = vmatprep.mubr.f32.mxu0 0.0
    %434 = vmatmul.mubr.f32.gmra.mrb[0].mxu0 %v43
    %v435 = vpop.f32.mrb[0].mxu0
    %v436 = vadd.f32 %v322, %v435
    %v437 = vpop.f32.mrb[0].mxu0
    %438 = vmatprep.mubr.f32.mxu0 0.0
    %439 = vmatmul.mubr.f32.gmra.mrb[0].mxu0 %v44
    %v440 = vpop.f32.mrb[0].mxu0
    %v441 = vadd.f32 %v327, %v440
    %v442 = vpop.f32.mrb[0].mxu0
    %443 = vmatprep.mubr.f32.mxu0 0.0
    %444 = vmatmul.mubr.f32.gmra.mrb[0].mxu0 %v45
    %v445 = vpop.f32.mrb[0].mxu0
    %v446 = vadd.f32 %v332, %v445
    %v447 = vpop.f32.mrb[0].mxu0
    %448 = vmatprep.mubr.f32.mxu0 0.0
    %449 = vmatmul.mubr.f32.gmra.mrb[0].mxu0 %v46
    %v450 = vpop.f32.mrb[0].mxu0
    %v451 = vadd.f32 %v337, %v450
    %v452 = vpop.f32.mrb[0].mxu0
    %453 = vmatprep.mubr.f32.mxu0 0.0
    %454 = vmatmul.mubr.f32.gmra.mrb[0].mxu0 %v47
    %v455 = vpop.f32.mrb[0].mxu0
    %v456 = vadd.f32 %v342, %v455
    %v457 = vpop.f32.mrb[0].mxu0
    %458 = vmatprep.mubr.f32.mxu0 0.0
    %459 = vmatmul.mubr.f32.gmra.mrb[0].mxu0 %v48
    %v460 = vpop.f32.mrb[0].mxu0
    %v461 = vadd.f32 %v347, %v460
    %v462 = vpop.f32.mrb[0].mxu0
    %463 = vmatprep.mubr.f32.mxu0 0.0
    %464 = vmatmul.mubr.f32.gmra.mrb[0].mxu0 %v49
    %v465 = vpop.f32.mrb[0].mxu0
    %v466 = vadd.f32 %v352, %v465
    %v467 = vpop.f32.mrb[0].mxu0
    %468 = vmatprep.mubr.f32.mxu0 0.0
    %469 = vmatmul.mubr.f32.gmra.mrb[0].mxu0 %v50
    %v470 = vpop.f32.mrb[0].mxu0
    %v471 = vadd.f32 %v357, %v470
    %v472 = vpop.f32.mrb[0].mxu0
    %473 = vdwg.mxu0
    %v474 = vmul.f32 %v426, 0.5
    %v475 = vmul.f32 %v431, 0.5
    %v476 = vmul.f32 %v436, 0.5
    %v477 = vmul.f32 %v441, 0.5
    %v478 = vmul.f32 %v446, 0.5
    %v479 = vmul.f32 %v451, 0.5
    %v480 = vmul.f32 %v456, 0.5
    %v481 = vmul.f32 %v461, 0.5
    %v482 = vmul.f32 %v466, 0.5
    %v483 = vmul.f32 %v471, 0.5
    %v484 = vtanh.pop %v474
    %v485 = vtanh.pop %v475
    %v486 = vtanh.pop %v476
    %v487 = vtanh.pop %v477
    %v488 = vtanh.pop %v478
    %v489 = vtanh.pop %v479
    %v490 = vtanh.pop %v480
    %v491 = vtanh.pop %v481
    %v492 = vtanh.pop %v482
    %v493 = vtanh.pop %v483
    %v494 = vmul.f32 %v484, 0.5
    %v495 = vmul.f32 %v485, 0.5
    %v496 = vmul.f32 %v486, 0.5
    %v497 = vmul.f32 %v487, 0.5
    %v498 = vmul.f32 %v488, 0.5
    %v499 = vmul.f32 %v489, 0.5
    %v500 = vmul.f32 %v490, 0.5
    %v501 = vmul.f32 %v491, 0.5
    %v502 = vmul.f32 %v492, 0.5
    %v503 = vmul.f32 %v493, 0.5
    %v504 = vadd.f32 %v494, 0.5
    %v505 = vadd.f32 %v495, 0.5
    %v506 = vadd.f32 %v496, 0.5
    %v507 = vadd.f32 %v497, 0.5
    %v508 = vadd.f32 %v498, 0.5
    %v509 = vadd.f32 %v499, 0.5
    %v510 = vadd.f32 %v500, 0.5
    %v511 = vadd.f32 %v501, 0.5
    %v512 = vadd.f32 %v502, 0.5
    %v513 = vadd.f32 %v503, 0.5
    %514 = vset.pattern.permute.xlu0 3
    %515 = vperm.xlu0 %514, %v51
    %v516 = vpop.permute.xlu0 %515
    %518 = vset.pattern.permute.xlu0 3
    %519 = vperm.xlu0 %518, %v52
    %v520 = vpop.permute.xlu0 %519
    %522 = vset.pattern.permute.xlu0 3
    %523 = vperm.xlu0 %522, %v53
    %v524 = vpop.permute.xlu0 %523
    %526 = vset.pattern.permute.xlu0 3
    %527 = vperm.xlu0 %526, %v54
    %v528 = vpop.permute.xlu0 %527
    %530 = vset.pattern.permute.xlu0 3
    %531 = vperm.xlu0 %530, %v55
    %v532 = vpop.permute.xlu0 %531
    %534 = vset.pattern.permute.xlu0 3
    %535 = vperm.xlu0 %534, %v56
    %v536 = vpop.permute.xlu0 %535
    %538 = vset.pattern.permute.xlu0 3
    %539 = vperm.xlu0 %538, %v57
    %v540 = vpop.permute.xlu0 %539
    %542 = vset.pattern.permute.xlu0 3
    %543 = vperm.xlu0 %542, %v58
    %v544 = vpop.permute.xlu0 %543
    %546 = vset.pattern.permute.xlu0 3
    %547 = vperm.xlu0 %546, %v59
    %v548 = vpop.permute.xlu0 %547
    %550 = vset.pattern.permute.xlu0 3
    %551 = vperm.xlu0 %550, %v60
    %v552 = vpop.permute.xlu0 %551
    %v554 = vmul.f32 %v516, %v504
    %v555 = vmul.f32 %v520, %v505
    %v556 = vmul.f32 %v524, %v506
    %v557 = vmul.f32 %v528, %v507
    %v558 = vmul.f32 %v532, %v508
    %v559 = vmul.f32 %v536, %v509
    %v560 = vmul.f32 %v540, %v510
    %v561 = vmul.f32 %v544, %v511
    %v562 = vmul.f32 %v548, %v512
    %v563 = vmul.f32 %v552, %v513
    %v564 = vadd.f32 %v554, %v555
    %v565 = vadd.f32 %v564, %v556
    %v566 = vadd.f32 %v565, %v557
    %v567 = vadd.f32 %v566, %v558
    %v568 = vadd.f32 %v567, %v559
    %v569 = vadd.f32 %v568, %v560
    %v570 = vadd.f32 %v569, %v561
    %v571 = vadd.f32 %v570, %v562
    %v572 = vadd.f32 %v571, %v563
    %v573 = vrot.slane %v572, 4
    %v574 = vadd.f32 %v572, %v573
    %v575 = vrot.slane %v574, 2
    %v576 = vadd.f32 %v574, %v575
    %v577 = vrot.slane %v576, 1
    %v578 = vadd.f32 %v576, %v577
    %580 = vset.pattern.permute.xlu0 5
    %581 = vperm.xlu0 %580, %v61
    %v582 = vpop.permute.xlu0 %581
    %v584 = vadd.f32 %v578, %v582
    %585 = vset.pattern.permute.xlu0 4
    %586 = vperm.xlu0 %585, %v51
    %v587 = vpop.permute.xlu0 %586
    %589 = vset.pattern.permute.xlu0 4
    %590 = vperm.xlu0 %589, %v52
    %v591 = vpop.permute.xlu0 %590
    %593 = vset.pattern.permute.xlu0 4
    %594 = vperm.xlu0 %593, %v53
    %v595 = vpop.permute.xlu0 %594
    %597 = vset.pattern.permute.xlu0 4
    %598 = vperm.xlu0 %597, %v54
    %v599 = vpop.permute.xlu0 %598
    %601 = vset.pattern.permute.xlu0 4
    %602 = vperm.xlu0 %601, %v55
    %v603 = vpop.permute.xlu0 %602
    %605 = vset.pattern.permute.xlu0 4
    %606 = vperm.xlu0 %605, %v56
    %v607 = vpop.permute.xlu0 %606
    %609 = vset.pattern.permute.xlu0 4
    %610 = vperm.xlu0 %609, %v57
    %v611 = vpop.permute.xlu0 %610
    %613 = vset.pattern.permute.xlu0 4
    %614 = vperm.xlu0 %613, %v58
    %v615 = vpop.permute.xlu0 %614
    %617 = vset.pattern.permute.xlu0 4
    %618 = vperm.xlu0 %617, %v59
    %v619 = vpop.permute.xlu0 %618
    %621 = vset.pattern.permute.xlu0 4
    %622 = vperm.xlu0 %621, %v60
    %v623 = vpop.permute.xlu0 %622
    %v625 = vmul.f32 %v587, %v504
    %v626 = vmul.f32 %v591, %v505
    %v627 = vmul.f32 %v595, %v506
    %v628 = vmul.f32 %v599, %v507
    %v629 = vmul.f32 %v603, %v508
    %v630 = vmul.f32 %v607, %v509
    %v631 = vmul.f32 %v611, %v510
    %v632 = vmul.f32 %v615, %v511
    %v633 = vmul.f32 %v619, %v512
    %v634 = vmul.f32 %v623, %v513
    %v635 = vadd.f32 %v625, %v626
    %v636 = vadd.f32 %v635, %v627
    %v637 = vadd.f32 %v636, %v628
    %v638 = vadd.f32 %v637, %v629
    %v639 = vadd.f32 %v638, %v630
    %v640 = vadd.f32 %v639, %v631
    %v641 = vadd.f32 %v640, %v632
    %v642 = vadd.f32 %v641, %v633
    %v643 = vadd.f32 %v642, %v634
    %v644 = vrot.slane %v643, 4
    %v645 = vadd.f32 %v643, %v644
    %v646 = vrot.slane %v645, 2
    %v647 = vadd.f32 %v645, %v646
    %v648 = vrot.slane %v647, 1
    %v649 = vadd.f32 %v647, %v648
    %650 = vset.pattern.permute.xlu0 6
    %651 = vperm.xlu0 %650, %v61
    %v652 = vpop.permute.xlu0 %651
    %v654 = vadd.f32 %v649, %v652
    %v655 = vmul.f32 %v584, 0.5
    %v656 = vtanh.pop %v655
    %v657 = vmul.f32 %v656, 0.5
    %v658 = vadd.f32 %v657, 0.5
    %659 = vst [vmem:[%s2] sm:$0x1] %v658
    %v660 = vmul.f32 %v654, 0.5
    %v661 = vtanh.pop %v660
    %v662 = vmul.f32 %v661, 0.5
    %v663 = vadd.f32 %v662, 0.5
    %664 = vst [vmem:[%s2 + $0x1] sm:$0x1] %v663
    // Predicated region
    $region14: #{prime_number_network.2} parent=1 // pred_check
      _
    $region15: #{prime_number_network.2} parent=1 // pred_check_branch
      %666 = sbr.rel (0) target = $region17
    $region16: #{prime_number_network.2} parent=1 // pred_region
      _
    $region17: #{prime_number_network.2} parent=1 // pred_fallthru
      _
    // Predicated region
    $region18: #{prime_number_network.2} parent=1 // pred_check
      _
    $region19: #{prime_number_network.2} parent=1 // pred_check_branch
      %668 = sbr.rel (0) target = $region21
    $region20: #{prime_number_network.2} parent=1 // pred_region
      _
    $region21: #{prime_number_network.2} parent=1 // pred_fallthru
      _
    %669 = vsyncpa [#allocation3], 1

</llo_original>
